<compile_context>
chip_gen: v7x
topology: tpu7x:2x2x1
jax: 0.10.0
libtpu: 0.0.40
codegen_flags: <defaults>
</compile_context>

<pallas_src>
import functools

import jax
import jax.numpy as jnp
from jax.experimental import pallas as pl
from jax.experimental.pallas import tpu as pltpu


def _se_kernel(x_ref, w1t_ref, b1_ref, w2_ref, b2_ref, o_ref, *, inv_hw: float):
    # x_ref block: (Nb, C, HWp) -- Nb images, lane-dense flattened spatial.
    x = x_ref[...]                                                 # native dtype

    # --- squeeze: global average pool (f32 accumulation, no slab upcast) ----
    pooled = jnp.sum(x, axis=-1, keepdims=True, dtype=jnp.float32) * inv_hw  # (Nb, C, 1)

    # --- excitation FC1: h = relu(pooled @ W1^T + b1) ------------------------
    # W1^T has shape (C, Cr) so the contraction is a sublane reduce; no
    # in-kernel transpose and no tiny MXU matmul on the hot path.
    w1t = w1t_ref[...].astype(jnp.float32)                         # (C, Cr)
    h = jnp.sum(pooled * w1t[None, :, :], axis=1, keepdims=True)   # (Nb, 1, Cr)
    h = jnp.maximum(h + b1_ref[...][None].astype(jnp.float32), 0.0)

    # --- excitation FC2: y = sigmoid(h @ W2^T + b2) --------------------------
    w2 = w2_ref[...].astype(jnp.float32)                           # (C, Cr)
    z = jnp.sum(w2[None, :, :] * h, axis=-1, keepdims=True)        # (Nb, C, 1)
    z = z + b2_ref[...][None].astype(jnp.float32)
    y = 1.0 / (1.0 + jnp.exp(-z))                                  # (Nb, C, 1)
    # TODO(synk): for big-channel SE stages (C>=1024, Cr>=64) route the two
    # contractions above through the MXU (jnp.dot) instead of the VPU path.

    # --- scale: single broadcast multiply pass at native dtype ---------------
    o_ref[...] = x * y.astype(o_ref.dtype)


def _round_up(a: int, b: int) -> int:
    return (a + b - 1) // b * b


def se_layer(x, w1, b1, w2, b2):
    """SE layer forward.

    x:  (N, C, H, W)
    w1: (Cr, C)   b1: (Cr,)     -- first Linear
    w2: (C, Cr)   b2: (C,)      -- second Linear
    Returns (N, C, H, W).
    """
    N, C, H, W = x.shape
    Cr = w1.shape[0]
    HW = H * W
    itemsize = jnp.dtype(x.dtype).itemsize

    # Lane-dense last dim: pad HW to a multiple of 128 (unmasked stores).
    HWp = _round_up(HW, 128)

    # Batch images per grid step so each step moves a ~MiB-scale slab, while
    # keeping at least 2 grid steps so ("parallel",) can use both TCs.
    per_image_bytes = C * HWp * itemsize
    target_bytes = 2 << 20                       # ~2 MiB input slab per step
    Nb = max(1, min(N, target_bytes // max(per_image_bytes, 1)))
    if N >= 2:
        Nb = max(1, min(Nb, (N + 1) // 2))       # grid length >= 2
    Np = _round_up(N, Nb)

    x_flat = x.reshape(N, C, HW)
    if HWp != HW:
        x_flat = jnp.pad(x_flat, ((0, 0), (0, 0), (0, HWp - HW)))
    if Np != N:
        x_flat = jnp.pad(x_flat, ((0, Np - N), (0, 0), (0, 0)))

    w1_t = w1.T                                  # (C, Cr)
    b1_r = b1.reshape(1, Cr)
    b2_r = b2.reshape(C, 1)

    # VMEM budget: double-buffered in + out blocks plus resident weights.
    block_bytes = Nb * C * HWp * itemsize
    weight_bytes = 2 * C * Cr * 4 + (C + Cr) * 4
    vmem_limit = 4 * block_bytes + 4 * weight_bytes + (2 << 20)
    vmem_limit = int(min(max(vmem_limit, 16 << 20), 48 << 20))
    # TODO(synk): for very large per-image slabs (>~8 MiB) split the spatial
    # axis into an "arbitrary" reduction grid axis with sum scratch + a
    # second scale pass instead of growing the block further.

    kernel = functools.partial(_se_kernel, inv_hw=1.0 / HW)

    out = pl.pallas_call(
        kernel,
        out_shape=jax.ShapeDtypeStruct((Np, C, HWp), x.dtype),
        grid_spec=pltpu.PrefetchScalarGridSpec(
            num_scalar_prefetch=0,
            grid=(Np // Nb,),
            in_specs=[
                pl.BlockSpec((Nb, C, HWp), lambda n: (n, 0, 0)),   # x
                pl.BlockSpec((C, Cr), lambda n: (0, 0)),           # W1^T (resident)
                pl.BlockSpec((1, Cr), lambda n: (0, 0)),           # b1
                pl.BlockSpec((C, Cr), lambda n: (0, 0)),           # W2
                pl.BlockSpec((C, 1), lambda n: (0, 0)),            # b2
            ],
            out_specs=pl.BlockSpec((Nb, C, HWp), lambda n: (n, 0, 0)),
        ),
        compiler_params=pltpu.CompilerParams(
            dimension_semantics=("parallel",),
            vmem_limit_bytes=vmem_limit),
    )(x_flat, w1_t, b1_r, w2, b2_r)

    return out[:N, :, :HW].reshape(N, C, H, W)


def _reference(x, w1, b1, w2, b2):
    # Pure-JAX reference matching the PyTorch forward.
    y = jnp.mean(x, axis=(2, 3))                          # (N, C)
    y = jnp.maximum(y @ w1.T + b1, 0.0)                   # (N, Cr)
    y = 1.0 / (1.0 + jnp.exp(-(y @ w2.T + b2)))           # (N, C)
    return x * y[:, :, None, None]


def _run_case(key, N, C, H, W, reduction):
    kx, k1, kb1, k2, kb2 = jax.random.split(key, 5)
    Cr = C // reduction
    x = jax.random.normal(kx, (N, C, H, W), dtype=jnp.float32)
    w1 = jax.random.normal(k1, (Cr, C), dtype=jnp.float32) * 0.5
    b1 = jax.random.normal(kb1, (Cr,), dtype=jnp.float32) * 0.1
    w2 = jax.random.normal(k2, (C, Cr), dtype=jnp.float32) * 0.5
    b2 = jax.random.normal(kb2, (C,), dtype=jnp.float32) * 0.1

    out = jax.block_until_ready(se_layer(x, w1, b1, w2, b2))
    ref = _reference(x, w1, b1, w2, b2)
    assert out.shape == (N, C, H, W)
    assert jnp.allclose(out, ref, atol=1e-5, rtol=1e-5)


if __name__ == "__main__":
    key = jax.random.PRNGKey(0)
    k0, k1 = jax.random.split(key)

    # Primary case (matches the module's intended small config).
    _run_case(k0, N=2, C=4, H=16, W=16, reduction=1)
    # Exercises HW-padding (49 -> 128) and N-padding / multi-image blocks.
    _run_case(k1, N=3, C=8, H=7, W=7, reduction=2)

    print("KERNEL_OK")
</pallas_src>

<mosaic_0001>
module attributes {stable_mosaic.version = 11 : i64} {
  func.func @_se_kernel(%arg0: i32, %arg1: memref<1x4x256xf32, #tpu.memory_space<vmem>>, %arg2: memref<4x4xf32, #tpu.memory_space<vmem>>, %arg3: memref<1x4xf32, #tpu.memory_space<vmem>>, %arg4: memref<4x4xf32, #tpu.memory_space<vmem>>, %arg5: memref<4x1xf32, #tpu.memory_space<vmem>>, %arg6: memref<1x4x256xf32, #tpu.memory_space<vmem>>) attributes {dimension_semantics = [#tpu.dimension_semantics<parallel>], iteration_bounds = array<i64: 2>, scalar_prefetch = 0 : i64, scratch_operands = 0 : i64, tpu.core_type = #tpu.core_type<tc>, window_params = [{transform_indices = @transform_0, window_bounds = array<i64: 1, 4, 256>}, {pipeline_mode = #tpu.pipeline_mode<synchronous>, transform_indices = @transform_1, window_bounds = array<i64: 4, 4>}, {pipeline_mode = #tpu.pipeline_mode<synchronous>, transform_indices = @transform_2, window_bounds = array<i64: 1, 4>}, {pipeline_mode = #tpu.pipeline_mode<synchronous>, transform_indices = @transform_3, window_bounds = array<i64: 4, 4>}, {pipeline_mode = #tpu.pipeline_mode<synchronous>, transform_indices = @transform_4, window_bounds = array<i64: 4, 1>}, {transform_indices = @transform_5, window_bounds = array<i64: 1, 4, 256>}]} {
    %c0 = arith.constant 0 : index
    %c0_0 = arith.constant 0 : index
    %c0_1 = arith.constant 0 : index
    %0 = vector.load %arg1[%c0, %c0_0, %c0_1] : memref<1x4x256xf32, #tpu.memory_space<vmem>>, vector<1x4x256xf32>
    %cst = arith.constant dense<0.000000e+00> : vector<1x4xf32>
    %1 = vector.multi_reduction <add>, %0, %cst [2] : vector<1x4x256xf32> to vector<1x4xf32>
    %2 = vector.shape_cast %1 : vector<1x4xf32> to vector<1x4x1xf32>
    %cst_2 = arith.constant 3.906250e-03 : f32
    %3 = vector.broadcast %cst_2 : f32 to vector<1x4x1xf32>
    %4 = arith.mulf %2, %3 : vector<1x4x1xf32>
    %c0_3 = arith.constant 0 : index
    %c0_4 = arith.constant 0 : index
    %5 = vector.load %arg2[%c0_3, %c0_4] : memref<4x4xf32, #tpu.memory_space<vmem>>, vector<4x4xf32>
    %6 = vector.shape_cast %5 : vector<4x4xf32> to vector<1x4x4xf32>
    %7 = vector.broadcast %4 : vector<1x4x1xf32> to vector<1x4x4xf32>
    %8 = arith.mulf %7, %6 : vector<1x4x4xf32>
    %cst_5 = arith.constant dense<0.000000e+00> : vector<1x4xf32>
    %9 = vector.multi_reduction <add>, %8, %cst_5 [1] : vector<1x4x4xf32> to vector<1x4xf32>
    %10 = vector.shape_cast %9 : vector<1x4xf32> to vector<1x1x4xf32>
    %c0_6 = arith.constant 0 : index
    %c0_7 = arith.constant 0 : index
    %11 = vector.load %arg3[%c0_6, %c0_7] : memref<1x4xf32, #tpu.memory_space<vmem>>, vector<1x4xf32>
    %12 = vector.shape_cast %11 : vector<1x4xf32> to vector<1x1x4xf32>
    %13 = arith.addf %10, %12 : vector<1x1x4xf32>
    %cst_8 = arith.constant 0.000000e+00 : f32
    %14 = vector.broadcast %cst_8 : f32 to vector<1x1x4xf32>
    %15 = arith.maximumf %13, %14 : vector<1x1x4xf32>
    %c0_9 = arith.constant 0 : index
    %c0_10 = arith.constant 0 : index
    %16 = vector.load %arg4[%c0_9, %c0_10] : memref<4x4xf32, #tpu.memory_space<vmem>>, vector<4x4xf32>
    %17 = vector.shape_cast %16 : vector<4x4xf32> to vector<1x4x4xf32>
    %18 = vector.broadcast %15 : vector<1x1x4xf32> to vector<1x4x4xf32>
    %19 = arith.mulf %17, %18 : vector<1x4x4xf32>
    %cst_11 = arith.constant dense<0.000000e+00> : vector<1x4xf32>
    %20 = vector.multi_reduction <add>, %19, %cst_11 [2] : vector<1x4x4xf32> to vector<1x4xf32>
    %21 = vector.shape_cast %20 : vector<1x4xf32> to vector<1x4x1xf32>
    %c0_12 = arith.constant 0 : index
    %c0_13 = arith.constant 0 : index
    %22 = vector.load %arg5[%c0_12, %c0_13] : memref<4x1xf32, #tpu.memory_space<vmem>>, vector<4x1xf32>
    %23 = vector.shape_cast %22 : vector<4x1xf32> to vector<1x4x1xf32>
    %24 = arith.addf %21, %23 : vector<1x4x1xf32>
    %cst_14 = arith.constant 0.000000e+00 : f32
    %25 = vector.broadcast %cst_14 : f32 to vector<1x4x1xf32>
    %26 = arith.subf %25, %24 : vector<1x4x1xf32>
    %27 = math.exp %26 : vector<1x4x1xf32>
    %cst_15 = arith.constant 1.000000e+00 : f32
    %28 = vector.broadcast %cst_15 : f32 to vector<1x4x1xf32>
    %29 = arith.addf %28, %27 : vector<1x4x1xf32>
    %cst_16 = arith.constant 1.000000e+00 : f32
    %30 = vector.broadcast %cst_16 : f32 to vector<1x4x1xf32>
    %31 = arith.divf %30, %29 : vector<1x4x1xf32>
    %32 = vector.broadcast %31 : vector<1x4x1xf32> to vector<1x4x256xf32>
    %33 = arith.mulf %0, %32 : vector<1x4x256xf32>
    %c0_17 = arith.constant 0 : index
    %c0_18 = arith.constant 0 : index
    %c0_19 = arith.constant 0 : index
    %34 = vector.load %arg6[%c0_17, %c0_18, %c0_19] : memref<1x4x256xf32, #tpu.memory_space<vmem>>, vector<1x4x256xf32>
    tpu.vector_store %arg6[%c0_17, %c0_18, %c0_19], %33 {strides = array<i32>} : memref<1x4x256xf32, #tpu.memory_space<vmem>>, vector<1x4x256xf32>,
    return
  }
  func.func @transform_0(%arg0: i32) -> (i32, i32, i32) {
    %c0_i32 = arith.constant 0 : i32
    %c0_i32_0 = arith.constant 0 : i32
    %c0_i32_1 = arith.constant 0 : i32
    return %arg0, %c0_i32, %c0_i32_0 : i32, i32, i32
  }
  func.func @transform_1(%arg0: i32) -> (i32, i32) {
    %c0_i32 = arith.constant 0 : i32
    %c0_i32_0 = arith.constant 0 : i32
    %c0_i32_1 = arith.constant 0 : i32
    return %c0_i32, %c0_i32_0 : i32, i32
  }
  func.func @transform_2(%arg0: i32) -> (i32, i32) {
    %c0_i32 = arith.constant 0 : i32
    %c0_i32_0 = arith.constant 0 : i32
    %c0_i32_1 = arith.constant 0 : i32
    return %c0_i32, %c0_i32_0 : i32, i32
  }
  func.func @transform_3(%arg0: i32) -> (i32, i32) {
    %c0_i32 = arith.constant 0 : i32
    %c0_i32_0 = arith.constant 0 : i32
    %c0_i32_1 = arith.constant 0 : i32
    return %c0_i32, %c0_i32_0 : i32, i32
  }
  func.func @transform_4(%arg0: i32) -> (i32, i32) {
    %c0_i32 = arith.constant 0 : i32
    %c0_i32_0 = arith.constant 0 : i32
    %c0_i32_1 = arith.constant 0 : i32
    return %c0_i32, %c0_i32_0 : i32, i32
  }
  func.func @transform_5(%arg0: i32) -> (i32, i32, i32) {
    %c0_i32 = arith.constant 0 : i32
    %c0_i32_0 = arith.constant 0 : i32
    %c0_i32_1 = arith.constant 0 : i32
    return %arg0, %c0_i32, %c0_i32_0 : i32, i32, i32
  }
}

</mosaic_0001>

<llo_original>
// kernel: tpu_custom_call.1
$region0: #{tpu_custom_call.1}
  #allocation0 [shape = 'u32[]', space=smem, size = 0x4, offset = 0x4, fixed_abs, tag = 'smem constant byte address 0x4 - core index']
  #allocation1 [shape = 'u32[144,128]{1,0:T(1,128)}', space=vmem, size = 0x12000, scoped, tag = 'internal scratch']
  %s0 = inlined_call_operand.hbm [shape: f32[2,4,256], index: 0, kind: input, shape index: {}]
  %s1 = inlined_call_operand.vmem [shape: f32[4,4], index: 1, kind: input, shape index: {}]
  %s2 = inlined_call_operand.vmem [shape: f32[1,4], index: 2, kind: input, shape index: {}]
  %s3 = inlined_call_operand.vmem [shape: f32[4,4], index: 3, kind: input, shape index: {}]
  %s4 = inlined_call_operand.vmem [shape: f32[4,1], index: 4, kind: input, shape index: {}]
  %s5 = inlined_call_operand.hbm [shape: f32[2,4,256], index: 5, kind: output, shape index: {}]
  %s6 = sld [smem:[#allocation0]]
  $region57: #{tpu_custom_call.1} parent=0
    _
  %s8 = ssub.s32 1, %s6
  %s9 = scalar_select 0, %s8, %s6
  $region1: #{tpu_custom_call.1} parent=0
    #allocation2 [shape = 'u8[8192]{0}', space=vmem, size = 0x2000, scoped, tag = 'input window, operand 0']
    #allocation3 [shape = 's32[2]{0}', space=sflag, size = 0x8, scoped, tag = 'scoped memory for tpu_custom_call.1']
    #allocation4 [shape = 's32[2]{0}', space=sflag, size = 0x8, scoped, tag = 'scoped memory for tpu_custom_call.1']
    #allocation5 [shape = 'u8[8192]{0}', space=vmem, size = 0x2000, scoped, tag = 'output window, operand 0']
    %10 = vsyncpa [#allocation3], 0
    %s11 = scalar_lea.sflag [#allocation3], 1
    %12 = vsyncpa %s11, 0
    %13 = vsyncpa [#allocation4], 0
    %s14 = scalar_lea.sflag [#allocation4], 1
    %15 = vsyncpa %s14, 0
    loop: start=0, step=1, limit=4
    $region2: #{tpu_custom_call.1} parent=1 // loop_pre_header
      _
    $region3: #{tpu_custom_call.1} parent=1 // loop_header
      %s17 = sphi 0, %s21
      %p18 = scmp.ge.s32.totalorder %s17, 4
      %s27 = sphi 0, %s29
      %s30 = sphi 0, %s27
      %s31 = sphi 0, %s30
      %s47 = sphi 0, %s31
      %s51 = sphi 0, %s51
      %s53 = sphi 0, %s51
      %s54 = sphi 0, %s53
      %s68 = sphi 0, %s54
      %s72 = sphi 0, %s72
      %s74 = sphi 0, %s72
      %s75 = sphi 0, %s74
      %s89 = sphi 0, %s75
      %s93 = sphi 0, %s93
      %s95 = sphi 0, %s93
      %s96 = sphi 0, %s95
      %s110 = sphi 0, %s96
      %s114 = sphi 0, %s114
      %s116 = sphi 0, %s114
      %s117 = sphi 0, %s116
      %s131 = sphi 0, %s117
      %s137 = sphi 0, %s139
      %s140 = sphi 0, %s137
      %s141 = sphi 0, %s140
      %s157 = sphi 0, %s141
    $region4: #{tpu_custom_call.1} parent=1 // loop_header_branch
      %20 = sbr.rel (%p18) target = $region8
    $region5: #{tpu_custom_call.1} parent=1 // loop_body
      %s22 = ssub.s32 %s17, 1
      %s23 = ssub.s32 %s17, 2
      %s24 = sadd.s32 %s17, 1
      %s25 = ssub.s32 %s17, %s24
      %p26 = scmp.eq.s32.totalorder %s25, 0
      %s28 = sadd.s32 %s27, 1
      %s29 = scalar_select %p26, %s27, %s28
      %p32 = pneg %p26
      %p33 = scmp.eq.s32.totalorder %s17, 1
      %p34 = por %p32, %p33
      %p35 = scmp.ne.s32.totalorder %s27, %s30
      %p36 = scmp.eq.s32.totalorder %s17, 0
      %p37 = por %p35, %p36
      %p38 = scmp.ne.s32.totalorder %s27, %s30
      %p39 = scmp.eq.s32.totalorder %s22, 1
      %p40 = por %p38, %p39
      %p41 = scmp.ne.s32.totalorder %s30, %s31
      %p42 = scmp.eq.s32.totalorder %s22, 0
      %p43 = por %p41, %p42
      %p44 = scmp.ne.s32.totalorder %s30, %s31
      %p45 = scmp.eq.s32.totalorder %s23, 1
      %p46 = por %p44, %p45
      %p48 = scmp.ne.s32.totalorder %s31, %s47
      %p49 = scmp.eq.s32.totalorder %s23, 0
      %p50 = por %p48, %p49
      %s52 = sadd.s32 %s51, 1
      %p55 = scmp.eq.s32.totalorder %s17, 1
      %p56 = scmp.ne.s32.totalorder %s51, %s53
      %p57 = scmp.eq.s32.totalorder %s17, 0
      %p58 = por %p56, %p57
      %p59 = scmp.ne.s32.totalorder %s51, %s53
      %p60 = scmp.eq.s32.totalorder %s22, 1
      %p61 = por %p59, %p60
      %p62 = scmp.ne.s32.totalorder %s53, %s54
      %p63 = scmp.eq.s32.totalorder %s22, 0
      %p64 = por %p62, %p63
      %p65 = scmp.ne.s32.totalorder %s53, %s54
      %p66 = scmp.eq.s32.totalorder %s23, 1
      %p67 = por %p65, %p66
      %p69 = scmp.ne.s32.totalorder %s54, %s68
      %p70 = scmp.eq.s32.totalorder %s23, 0
      %p71 = por %p69, %p70
      %s73 = sadd.s32 %s72, 1
      %p76 = scmp.eq.s32.totalorder %s17, 1
      %p77 = scmp.ne.s32.totalorder %s72, %s74
      %p78 = scmp.eq.s32.totalorder %s17, 0
      %p79 = por %p77, %p78
      %p80 = scmp.ne.s32.totalorder %s72, %s74
      %p81 = scmp.eq.s32.totalorder %s22, 1
      %p82 = por %p80, %p81
      %p83 = scmp.ne.s32.totalorder %s74, %s75
      %p84 = scmp.eq.s32.totalorder %s22, 0
      %p85 = por %p83, %p84
      %p86 = scmp.ne.s32.totalorder %s74, %s75
      %p87 = scmp.eq.s32.totalorder %s23, 1
      %p88 = por %p86, %p87
      %p90 = scmp.ne.s32.totalorder %s75, %s89
      %p91 = scmp.eq.s32.totalorder %s23, 0
      %p92 = por %p90, %p91
      %s94 = sadd.s32 %s93, 1
      %p97 = scmp.eq.s32.totalorder %s17, 1
      %p98 = scmp.ne.s32.totalorder %s93, %s95
      %p99 = scmp.eq.s32.totalorder %s17, 0
      %p100 = por %p98, %p99
      %p101 = scmp.ne.s32.totalorder %s93, %s95
      %p102 = scmp.eq.s32.totalorder %s22, 1
      %p103 = por %p101, %p102
      %p104 = scmp.ne.s32.totalorder %s95, %s96
      %p105 = scmp.eq.s32.totalorder %s22, 0
      %p106 = por %p104, %p105
      %p107 = scmp.ne.s32.totalorder %s95, %s96
      %p108 = scmp.eq.s32.totalorder %s23, 1
      %p109 = por %p107, %p108
      %p111 = scmp.ne.s32.totalorder %s96, %s110
      %p112 = scmp.eq.s32.totalorder %s23, 0
      %p113 = por %p111, %p112
      %s115 = sadd.s32 %s114, 1
      %p118 = scmp.eq.s32.totalorder %s17, 1
      %p119 = scmp.ne.s32.totalorder %s114, %s116
      %p120 = scmp.eq.s32.totalorder %s17, 0
      %p121 = por %p119, %p120
      %p122 = scmp.ne.s32.totalorder %s114, %s116
      %p123 = scmp.eq.s32.totalorder %s22, 1
      %p124 = por %p122, %p123
      %p125 = scmp.ne.s32.totalorder %s116, %s117
      %p126 = scmp.eq.s32.totalorder %s22, 0
      %p127 = por %p125, %p126
      %p128 = scmp.ne.s32.totalorder %s116, %s117
      %p129 = scmp.eq.s32.totalorder %s23, 1
      %p130 = por %p128, %p129
      %p132 = scmp.ne.s32.totalorder %s117, %s131
      %p133 = scmp.eq.s32.totalorder %s23, 0
      %p134 = por %p132, %p133
      %s135 = ssub.s32 %s17, %s24
      %p136 = scmp.eq.s32.totalorder %s135, 0
      %s138 = sadd.s32 %s137, 1
      %s139 = scalar_select %p136, %s137, %s138
      %p142 = pneg %p136
      %p143 = scmp.eq.s32.totalorder %s17, 1
      %p144 = por %p142, %p143
      %p145 = scmp.ne.s32.totalorder %s137, %s140
      %p146 = scmp.eq.s32.totalorder %s17, 0
      %p147 = por %p145, %p146
      %p148 = scmp.ne.s32.totalorder %s137, %s140
      %p149 = scmp.eq.s32.totalorder %s22, 1
      %p150 = por %p148, %p149
      %p151 = scmp.ne.s32.totalorder %s140, %s141
      %p152 = scmp.eq.s32.totalorder %s22, 0
      %p153 = por %p151, %p152
      %p154 = scmp.ne.s32.totalorder %s140, %s141
      %p155 = scmp.eq.s32.totalorder %s23, 1
      %p156 = por %p154, %p155
      %p158 = scmp.ne.s32.totalorder %s141, %s157
      %p159 = scmp.eq.s32.totalorder %s23, 0
      %p160 = por %p158, %p159
      %p161 = scmp.le.s32.totalorder 1, %s17
      %p162 = scmp.lt.s32.totalorder %s17, 3
      %p163 = pnand %p161, %p162
      %p164 = pneg %p163
      // Predicated region
      $region9: #{tpu_custom_call.1} parent=5 // pred_check
        _
      $region10: #{tpu_custom_call.1} parent=5 // pred_check_branch
        %166 = sbr.rel (%p163) target = $region12
      $region11: #{tpu_custom_call.1} parent=5 // pred_region
        %s167 = ssub.s32 %s17, 1
        // Predicated region
        $region13: #{tpu_custom_call.1} parent=11 // pred_check
          %p168 = pneg %p64
        $region14: #{tpu_custom_call.1} parent=11 // pred_check_branch
          %170 = sbr.rel (%p168) target = $region16
        $region15: #{tpu_custom_call.1} parent=11 // pred_region
          _
        $region16: #{tpu_custom_call.1} parent=11 // pred_fallthru
          _
        // Predicated region
        $region17: #{tpu_custom_call.1} parent=11 // pred_check
          %p171 = pneg %p85
        $region18: #{tpu_custom_call.1} parent=11 // pred_check_branch
          %173 = sbr.rel (%p171) target = $region20
        $region19: #{tpu_custom_call.1} parent=11 // pred_region
          _
        $region20: #{tpu_custom_call.1} parent=11 // pred_fallthru
          _
        // Predicated region
        $region21: #{tpu_custom_call.1} parent=11 // pred_check
          %p174 = pneg %p106
        $region22: #{tpu_custom_call.1} parent=11 // pred_check_branch
          %176 = sbr.rel (%p174) target = $region24
        $region23: #{tpu_custom_call.1} parent=11 // pred_region
          _
        $region24: #{tpu_custom_call.1} parent=11 // pred_fallthru
          _
        // Predicated region
        $region25: #{tpu_custom_call.1} parent=11 // pred_check
          %p177 = pneg %p127
        $region26: #{tpu_custom_call.1} parent=11 // pred_check_branch
          %179 = sbr.rel (%p177) target = $region28
        $region27: #{tpu_custom_call.1} parent=11 // pred_region
          _
        $region28: #{tpu_custom_call.1} parent=11 // pred_fallthru
          _
      $region12: #{tpu_custom_call.1} parent=5 // pred_fallthru
        _
      %p180 = scmp.lt.s32.totalorder %s17, 2
      // Predicated region
      $region29: #{tpu_custom_call.1} parent=5 // pred_check
        %p181 = pneg %p180
      $region30: #{tpu_custom_call.1} parent=5 // pred_check_branch
        %183 = sbr.rel (%p181) target = $region32
      $region31: #{tpu_custom_call.1} parent=5 // pred_region
        // Predicated region
        $region33: #{tpu_custom_call.1} parent=31 // pred_check
          %p184 = pneg %p37
        $region34: #{tpu_custom_call.1} parent=31 // pred_check_branch
          %186 = sbr.rel (%p184) target = $region36
        $region35: #{tpu_custom_call.1} parent=31 // pred_region
          %s187 = sand.u32 %s27, 1
          %s188 = scalar_lea.sflag [#allocation3], %s187
          %s189 = sand.u32 %s27, 1
          %s190 = smul.addr %s189, 8
          %s191 = scalar_lea.vmem [#allocation2], %s190
          %s193 = ssub.s32 128, 128
          %194 = vsyncadd %s188, %s193
          %s195 = smul.addr %s17, 2
          %s196 = smul.addr %s195, 64
          %s197 = scalar_lea.hbm %s0, %s196
          %s199 = sshll.u32 %s191, 4
          %s200 = int_to_ptr.vmem [resolvable:$true] %s199
          %202 = dma.hbm_to_vmem [thread:$0]  %s197, 128, %s200, %s188
        $region36: #{tpu_custom_call.1} parent=31 // pred_fallthru
          _
      $region32: #{tpu_custom_call.1} parent=5 // pred_fallthru
        _
      %p203 = scmp.le.s32.totalorder 1, %s17
      %p204 = scmp.lt.s32.totalorder %s17, 3
      %p205 = pnand %p203, %p204
      %p206 = pneg %p205
      // Predicated region
      $region37: #{tpu_custom_call.1} parent=5 // pred_check
        _
      $region38: #{tpu_custom_call.1} parent=5 // pred_check_branch
        %208 = sbr.rel (%p205) target = $region40
      $region39: #{tpu_custom_call.1} parent=5 // pred_region
        %s209 = ssub.s32 %s17, 1
        %s210 = sand.u32 %s30, 1
        %s211 = scalar_lea.sflag [#allocation3], %s210
        %s212 = sand.u32 %s30, 1
        %s213 = smul.addr %s212, 8
        %s214 = scalar_lea.vmem [#allocation2], %s213
        // Predicated region
        $region41: #{tpu_custom_call.1} parent=39 // pred_check
          %p215 = pneg %p43
        $region42: #{tpu_custom_call.1} parent=39 // pred_check_branch
          %217 = sbr.rel (%p215) target = $region44
        $region43: #{tpu_custom_call.1} parent=39 // pred_region
          %218 = dma.done %s211, 128
        $region44: #{tpu_custom_call.1} parent=39 // pred_fallthru
          _
        %s219 = sand.u32 %s30, 1
        %s220 = scalar_lea.sflag [#allocation3], %s219
        %s221 = sand.u32 %s30, 1
        %s222 = smul.addr %s221, 8
        %s223 = scalar_lea.vmem [#allocation2], %s222
        %p224 = pneg %p43
        %p225 = pneg %p40
        %p226 = pneg %p64
        %p227 = pneg %p61
        %p228 = pneg %p85
        %p229 = pneg %p82
        %p230 = pneg %p106
        %p231 = pneg %p103
        %p232 = pneg %p127
        %p233 = pneg %p124
        %p234 = pneg %p153
        %p235 = pneg %p150
        %s236 = sand.u32 %s140, 1
        %s237 = scalar_lea.sflag [#allocation4], %s236
        %s238 = sand.u32 %s140, 1
        %s239 = smul.addr %s238, 8
        %s240 = scalar_lea.vmem [#allocation5], %s239
        %v241 = vld [vmem:[%s214] sm:$0xff]
        %v243 = vcombine.high %v241, %v241
        %vm245 = vcmask 1043456
        %v246 = vsel %vm245, %v241, 0.0
        %v247 = vsel %vm245, %v243, 0.0
        %v248 = vadd.f32 %v246, %v247
        %249 = vadd.xlane.f32.xlu0 %v248
        %v250 = vpop.xlane.xlu0 %249
        %v251 = vmul.f32 %v250, 0.00390625
        %v252 = vld [vmem:[%s1] sm:$0xf]
        %v253 = vmul.f32 %v251, %v252
        %vm254 = vcmask 27648
        %v255 = vsel %vm254, %v253, 0.0
        %v256 = vrot.slane %v255, 4
        %v257 = vadd.f32 %v255, %v256
        %v258 = vrot.slane %v257, 2
        %v259 = vadd.f32 %v257, %v258
        %v260 = vrot.slane %v259, 1
        %v261 = vadd.f32 %v259, %v260
        %v262 = vld [vmem:[%s2] sm:$0x1]
        %v263 = vadd.f32 %v261, %v262
        %v264 = vmax.f32 %v263, 0.0
        %v265 = vld [vmem:[%s3] sm:$0xf]
        %v266 = vlaneseq
        %v267 = vshrl.u32 %v266, 7
        %v268 = vsub.s32 0, %v267
        %v269 = vrot.slane %v264, %v268
        %v270 = vmul.f32 %v265, %v269
        %v271 = vsel %vm254, %v270, 0.0
        %272 = vadd.xlane.f32.xlu0 %v271
        %v273 = vpop.xlane.xlu0 %272
        %v274 = vld [vmem:[%s4] sm:$0xf]
        %v275 = vadd.f32 %v273, %v274
        %v276 = vsub.f32 0.0, %v275
        %v277 = vmul.f32 %v276, 1.442695
        %v278 = vpow.pop %v277
        %v279 = vadd.f32 %v278, 1.0
        %v280 = vrcp.pop %v279
        %v281 = vmul.f32 1.0, %v280
        %283 = vset.pattern.permute.xlu0 0
        %284 = vperm.xlu0 %283, %v281
        %v285 = vpop.permute.xlu0 %284
        %v287 = vunpack.c.l.s4 839922192
        %v288 = vunpack.c.0.s8 %v287
        %v289 = vlaneseq
        %v290 = vshrl.u32 %v289, 7
        %v291 = vsub.s32 %v288, %v290
        %v292 = vrot.slane %v285, %v291
        %v294 = vmul.f32 %v241, %v292
        %295 = vst [vmem:[%s240] sm:$0xff] %v294
        %s296 = sand.u32 %s140, 1
        %s297 = scalar_lea.sflag [#allocation4], %s296
        %s298 = sand.u32 %s140, 1
        %s299 = smul.addr %s298, 8
        %s300 = scalar_lea.vmem [#allocation5], %s299
        // Predicated region
        $region45: #{tpu_custom_call.1} parent=39 // pred_check
          %p301 = pneg %p150
        $region46: #{tpu_custom_call.1} parent=39 // pred_check_branch
          %303 = sbr.rel (%p301) target = $region48
        $region47: #{tpu_custom_call.1} parent=39 // pred_region
          %s305 = ssub.s32 128, 128
          %306 = vsyncadd %s297, %s305
          %s307 = smul.addr %s22, 2
          %s308 = smul.addr %s307, 64
          %s309 = scalar_lea.hbm %s5, %s308
          %s311 = sshll.u32 %s300, 4
          %s312 = int_to_ptr.vmem [resolvable:$true] %s311
          %314 = dma.vmem_to_hbm [thread:$0]  %s312, 128, %s309, %s297
        $region48: #{tpu_custom_call.1} parent=39 // pred_fallthru
          _
      $region40: #{tpu_custom_call.1} parent=5 // pred_fallthru
        _
      %p315 = scmp.le.s32.totalorder 2, %s17
      // Predicated region
      $region49: #{tpu_custom_call.1} parent=5 // pred_check
        %p316 = pneg %p315
      $region50: #{tpu_custom_call.1} parent=5 // pred_check_branch
        %318 = sbr.rel (%p316) target = $region52
      $region51: #{tpu_custom_call.1} parent=5 // pred_region
        %s319 = ssub.s32 %s17, 2
        // Predicated region
        $region53: #{tpu_custom_call.1} parent=51 // pred_check
          %p320 = pneg %p156
        $region54: #{tpu_custom_call.1} parent=51 // pred_check_branch
          %322 = sbr.rel (%p320) target = $region56
        $region55: #{tpu_custom_call.1} parent=51 // pred_region
          %s323 = sand.u32 %s141, 1
          %s324 = scalar_lea.sflag [#allocation4], %s323
          %s325 = sand.u32 %s141, 1
          %s326 = smul.addr %s325, 8
          %s327 = scalar_lea.vmem [#allocation5], %s326
          %328 = dma.done %s324, 128
        $region56: #{tpu_custom_call.1} parent=51 // pred_fallthru
          _
      $region52: #{tpu_custom_call.1} parent=5 // pred_fallthru
        _
    $region6: #{tpu_custom_call.1} parent=1 // loop_footer
      %s21 = sadd.s32 1, %s17
    $region7: #{tpu_custom_call.1} parent=1 // loop_footer_branch
      %16 = sbr.rel target = $region3
    $region8: #{tpu_custom_call.1} parent=1 // loop_exit
      _
    %329 = vsyncpa [#allocation3], 1
    %s330 = scalar_lea.sflag [#allocation3], 1
    %331 = vsyncpa %s330, 1
    %332 = vsyncpa [#allocation4], 1
    %s333 = scalar_lea.sflag [#allocation4], 1
    %334 = vsyncpa %s333, 1

</llo_original>
